<compile_context>
chip_gen: v7x
topology: tpu7x:2x2x1
jax: 0.10.0
libtpu: 0.0.40
codegen_flags: <defaults>
</compile_context>

<pallas_src>
import functools

import jax
import jax.numpy as jnp
from jax.experimental import pallas as pl
from jax.experimental.pallas import tpu as pltpu


def _ts_std_kernel(x_ref, o_ref, *, window):
    """x_ref: (tb, T, tf) VMEM tile; o_ref: (tb, Nw, tf), Nw = T - window + 1."""
    x = x_ref[...].astype(jnp.float32)            # per-tile cast
    nw = o_ref.shape[1]

    # Pass 1: windowed sums -> means (W vectorized slice-adds, all positions).
    s1 = x[:, 0:nw, :]
    for r in range(1, window):                    # static, small trip count (W)
        s1 = s1 + x[:, r:r + nw, :]
    mean = s1 * (1.0 / window)

    # Pass 2: sum of squared deviations (two-pass => no cancellation, no clamp
    # needed, and NaN only appears in windows that actually contain a NaN).
    d = x[:, 0:nw, :] - mean
    ss = d * d
    for r in range(1, window):
        d = x[:, r:r + nw, :] - mean
        ss = ss + d * d

    inv_wm1 = (1.0 / (window - 1)) if window > 1 else float("nan")
    std = jnp.sqrt(ss * inv_wm1)
    # calc_std NaN patch: NaN std rows become (mean - mean).
    std = jnp.where(jnp.isnan(std), mean - mean, std)
    o_ref[...] = std.astype(o_ref.dtype)


def ts_std_forward(x, window=5, strides=1):
    """Pallas implementation of ts_std.forward. x: (B, T, F) -> (B, F, S)."""
    B, T, F = x.shape
    nw = T - window + 1
    starts = list(range(0, T - window + 1, strides))
    if (T - window) not in starts:
        starts.append(T - window)

    # Feature tile: full F unless F is a multiple of 128 (lane-aligned tiling).
    if F % 128 == 0:
        tf = 128
        while tf * 2 <= min(F, 512) and F % (tf * 2) == 0:
            tf *= 2
    else:
        tf = F
    # Batch tile: keep the per-step input block around <= ~2 MiB of f32 so the
    # double-buffered pipeline fits comfortably in scoped VMEM (v5e/v6e/v7x).
    tb = max(1, min(B, (2 << 20) // max(1, T * tf * 4)))
    while B % tb:
        tb -= 1

    kernel = functools.partial(_ts_std_kernel, window=window)
    all_std = pl.pallas_call(
        kernel,
        grid=(B // tb, F // tf),
        in_specs=[pl.BlockSpec((tb, T, tf), lambda i, j: (i, 0, j))],
        out_specs=pl.BlockSpec((tb, nw, tf), lambda i, j: (i, 0, j)),
        out_shape=jax.ShapeDtypeStruct((B, nw, F), x.dtype),
        compiler_params=pltpu.CompilerParams(
            dimension_semantics=("parallel", "parallel")),
    )(x)                                          # (B, Nw, F), all positions

    # Strided window selection (wrapper-side; no-op for strides == 1) and the
    # final layout transpose to (B, F, S).
    if starts == list(range(nw)):
        sel = all_std
    else:
        sel = jnp.take(all_std, jnp.asarray(starts, dtype=jnp.int32), axis=1)
    return jnp.transpose(sel, (0, 2, 1))


def _ts_std_reference(x, window=5, strides=1):
    """Pure-JAX reference mirroring the PyTorch forward, for validation."""
    B, T, F = x.shape
    starts = list(range(0, T - window + 1, strides))
    if (T - window) not in starts:
        starts.append(T - window)
    cols = []
    for s in starts:
        win = x[:, s:s + window, :]
        std = jnp.std(win, axis=1, ddof=1)
        mean = jnp.mean(win, axis=1)
        std = jnp.where(jnp.isnan(std), mean - mean, std)
        cols.append(std)                          # (B, F)
    out = jnp.stack(cols, axis=1)                 # (B, S, F)
    return jnp.transpose(out, (0, 2, 1))          # (B, F, S)


if __name__ == "__main__":
    # Small shapes consistent with the module: batch=2, time=16, features=4.
    B, T, F = 2, 16, 4
    window = 5

    key = jax.random.PRNGKey(0)
    x = jax.random.normal(key, (B, T, F), dtype=jnp.float32)

    # strides = 1 (default) check.
    out = jax.block_until_ready(ts_std_forward(x, window=window, strides=1))
    ref = _ts_std_reference(x, window=window, strides=1)
    assert out.shape == ref.shape, (out.shape, ref.shape)
    assert jnp.allclose(out, ref, atol=1e-5, rtol=1e-5)

    # strides = 2 check (exercises appended-last-window + selection path).
    out2 = jax.block_until_ready(ts_std_forward(x, window=window, strides=2))
    ref2 = _ts_std_reference(x, window=window, strides=2)
    assert out2.shape == ref2.shape, (out2.shape, ref2.shape)
    assert jnp.allclose(out2, ref2, atol=1e-5, rtol=1e-5)

    # NaN-containing input: per-window NaN semantics must match the reference.
    x_nan = x.at[0, 7, 1].set(jnp.nan)
    out3 = jax.block_until_ready(ts_std_forward(x_nan, window=window, strides=1))
    ref3 = _ts_std_reference(x_nan, window=window, strides=1)
    assert jnp.array_equal(jnp.isnan(out3), jnp.isnan(ref3))
    assert jnp.allclose(out3, ref3, atol=1e-5, rtol=1e-5, equal_nan=True)

    print("KERNEL_OK")
</pallas_src>

<mosaic_0001>
module attributes {stable_mosaic.version = 11 : i64} {
  func.func @_ts_std_kernel(%arg0: i32, %arg1: i32, %arg2: memref<2x16x4xf32, #tpu.memory_space<vmem>>, %arg3: memref<2x12x4xf32, #tpu.memory_space<vmem>>) attributes {dimension_semantics = [#tpu.dimension_semantics<parallel>, #tpu.dimension_semantics<parallel>], iteration_bounds = array<i64: 1, 1>, scalar_prefetch = 0 : i64, scratch_operands = 0 : i64, tpu.core_type = #tpu.core_type<tc>, window_params = [{transform_indices = @transform_0, window_bounds = array<i64: 2, 16, 4>}, {transform_indices = @transform_1, window_bounds = array<i64: 2, 12, 4>}]} {
    %c0 = arith.constant 0 : index
    %c0_0 = arith.constant 0 : index
    %c0_1 = arith.constant 0 : index
    %0 = vector.load %arg2[%c0, %c0_0, %c0_1] : memref<2x16x4xf32, #tpu.memory_space<vmem>>, vector<2x16x4xf32>
    %1 = vector.extract_strided_slice %0 {offsets = [0, 0, 0], sizes = [2, 12, 4], strides = [1, 1, 1]} : vector<2x16x4xf32> to vector<2x12x4xf32>
    %2 = vector.extract_strided_slice %0 {offsets = [0, 1, 0], sizes = [2, 12, 4], strides = [1, 1, 1]} : vector<2x16x4xf32> to vector<2x12x4xf32>
    %3 = arith.addf %1, %2 : vector<2x12x4xf32>
    %4 = vector.extract_strided_slice %0 {offsets = [0, 2, 0], sizes = [2, 12, 4], strides = [1, 1, 1]} : vector<2x16x4xf32> to vector<2x12x4xf32>
    %5 = arith.addf %3, %4 : vector<2x12x4xf32>
    %6 = vector.extract_strided_slice %0 {offsets = [0, 3, 0], sizes = [2, 12, 4], strides = [1, 1, 1]} : vector<2x16x4xf32> to vector<2x12x4xf32>
    %7 = arith.addf %5, %6 : vector<2x12x4xf32>
    %8 = vector.extract_strided_slice %0 {offsets = [0, 4, 0], sizes = [2, 12, 4], strides = [1, 1, 1]} : vector<2x16x4xf32> to vector<2x12x4xf32>
    %9 = arith.addf %7, %8 : vector<2x12x4xf32>
    %cst = arith.constant 2.000000e-01 : f32
    %10 = vector.broadcast %cst : f32 to vector<2x12x4xf32>
    %11 = arith.mulf %9, %10 : vector<2x12x4xf32>
    %12 = vector.extract_strided_slice %0 {offsets = [0, 0, 0], sizes = [2, 12, 4], strides = [1, 1, 1]} : vector<2x16x4xf32> to vector<2x12x4xf32>
    %13 = arith.subf %12, %11 : vector<2x12x4xf32>
    %14 = arith.mulf %13, %13 : vector<2x12x4xf32>
    %15 = vector.extract_strided_slice %0 {offsets = [0, 1, 0], sizes = [2, 12, 4], strides = [1, 1, 1]} : vector<2x16x4xf32> to vector<2x12x4xf32>
    %16 = arith.subf %15, %11 : vector<2x12x4xf32>
    %17 = arith.mulf %16, %16 : vector<2x12x4xf32>
    %18 = arith.addf %14, %17 : vector<2x12x4xf32>
    %19 = vector.extract_strided_slice %0 {offsets = [0, 2, 0], sizes = [2, 12, 4], strides = [1, 1, 1]} : vector<2x16x4xf32> to vector<2x12x4xf32>
    %20 = arith.subf %19, %11 : vector<2x12x4xf32>
    %21 = arith.mulf %20, %20 : vector<2x12x4xf32>
    %22 = arith.addf %18, %21 : vector<2x12x4xf32>
    %23 = vector.extract_strided_slice %0 {offsets = [0, 3, 0], sizes = [2, 12, 4], strides = [1, 1, 1]} : vector<2x16x4xf32> to vector<2x12x4xf32>
    %24 = arith.subf %23, %11 : vector<2x12x4xf32>
    %25 = arith.mulf %24, %24 : vector<2x12x4xf32>
    %26 = arith.addf %22, %25 : vector<2x12x4xf32>
    %27 = vector.extract_strided_slice %0 {offsets = [0, 4, 0], sizes = [2, 12, 4], strides = [1, 1, 1]} : vector<2x16x4xf32> to vector<2x12x4xf32>
    %28 = arith.subf %27, %11 : vector<2x12x4xf32>
    %29 = arith.mulf %28, %28 : vector<2x12x4xf32>
    %30 = arith.addf %26, %29 : vector<2x12x4xf32>
    %cst_2 = arith.constant 2.500000e-01 : f32
    %31 = vector.broadcast %cst_2 : f32 to vector<2x12x4xf32>
    %32 = arith.mulf %30, %31 : vector<2x12x4xf32>
    %33 = math.sqrt %32 : vector<2x12x4xf32>
    %34 = arith.cmpf one, %33, %33 : vector<2x12x4xf32>
    %35 = arith.subf %11, %11 : vector<2x12x4xf32>
    %36 = arith.select %34, %35, %33 : vector<2x12x4xi1>, vector<2x12x4xf32>
    %c0_3 = arith.constant 0 : index
    %c0_4 = arith.constant 0 : index
    %c0_5 = arith.constant 0 : index
    %37 = vector.load %arg3[%c0_3, %c0_4, %c0_5] : memref<2x12x4xf32, #tpu.memory_space<vmem>>, vector<2x12x4xf32>
    tpu.vector_store %arg3[%c0_3, %c0_4, %c0_5], %36 {strides = array<i32>} : memref<2x12x4xf32, #tpu.memory_space<vmem>>, vector<2x12x4xf32>,
    return
  }
  func.func @transform_0(%arg0: i32, %arg1: i32) -> (i32, i32, i32) {
    %c0_i32 = arith.constant 0 : i32
    %c0_i32_0 = arith.constant 0 : i32
    return %arg0, %c0_i32, %arg1 : i32, i32, i32
  }
  func.func @transform_1(%arg0: i32, %arg1: i32) -> (i32, i32, i32) {
    %c0_i32 = arith.constant 0 : i32
    %c0_i32_0 = arith.constant 0 : i32
    return %arg0, %c0_i32, %arg1 : i32, i32, i32
  }
}

</mosaic_0001>

<llo_original>
// kernel: tpu_custom_call.1
$region0: #{tpu_custom_call.1}
  #allocation0 [shape = 'u32[]', space=smem, size = 0x4, offset = 0x4, fixed_abs, tag = 'smem constant byte address 0x4 - core index']
  #allocation1 [shape = 'u32[144,128]{1,0:T(1,128)}', space=vmem, size = 0x12000, scoped, tag = 'internal scratch']
  %s0 = inlined_call_operand.vmem [shape: f32[2,16,4], index: 0, kind: input, shape index: {}]
  %s1 = inlined_call_operand.vmem [shape: f32[2,12,4], index: 1, kind: output, shape index: {}]
  %s2 = sld [smem:[#allocation0]]
  $region14: #{tpu_custom_call.1} parent=0
    _
  %s4 = ssub.s32 1, %s2
  %s5 = scalar_select 0, %s4, %s2
  // Predicated region
  $region2: #{tpu_custom_call.1} parent=0 // pred_check
    _
  $region3: #{tpu_custom_call.1} parent=0 // pred_check_branch
    %7 = sbr.rel (0) target = $region5
  $region4: #{tpu_custom_call.1} parent=0 // pred_region
    _
  $region5: #{tpu_custom_call.1} parent=0 // pred_fallthru
    _
  %v8 = vld [vmem:[%s0] sm:$0xff]
  %v9 = vld [vmem:[%s0 + $0x8] sm:$0xff]
  %v10 = vld [vmem:[%s0 + $0x10] sm:$0xff]
  %v11 = vld [vmem:[%s0 + $0x18] sm:$0xff]
  %vm16 = vcmask 1046528
  %v17 = vrot.slane %v8, 1
  %v18 = vrot.slane %v9, 1
  %v19 = vsel %vm16, %v17, %v18
  %v20 = vrot.slane %v10, 1
  %v21 = vrot.slane %v11, 1
  %v22 = vsel %vm16, %v20, %v21
  %v27 = vadd.f32 %v8, %v19
  %v28 = vadd.f32 %v9, %v18
  %v29 = vadd.f32 %v10, %v22
  %v30 = vadd.f32 %v11, %v21
  %vm31 = vcmask 1045504
  %v32 = vrot.slane %v8, 2
  %v33 = vrot.slane %v9, 2
  %v34 = vsel %vm31, %v32, %v33
  %v35 = vrot.slane %v10, 2
  %v36 = vrot.slane %v11, 2
  %v37 = vsel %vm31, %v35, %v36
  %v42 = vadd.f32 %v27, %v34
  %v43 = vadd.f32 %v28, %v33
  %v44 = vadd.f32 %v29, %v37
  %v45 = vadd.f32 %v30, %v36
  %vm46 = vcmask 1044480
  %v47 = vrot.slane %v8, 3
  %v48 = vrot.slane %v9, 3
  %v49 = vsel %vm46, %v47, %v48
  %v50 = vrot.slane %v10, 3
  %v51 = vrot.slane %v11, 3
  %v52 = vsel %vm46, %v50, %v51
  %v57 = vadd.f32 %v42, %v49
  %v58 = vadd.f32 %v43, %v48
  %v59 = vadd.f32 %v44, %v52
  %v60 = vadd.f32 %v45, %v51
  %vm61 = vcmask 1043456
  %v62 = vrot.slane %v8, 4
  %v63 = vrot.slane %v9, 4
  %v64 = vsel %vm61, %v62, %v63
  %v65 = vrot.slane %v10, 4
  %v66 = vrot.slane %v11, 4
  %v67 = vsel %vm61, %v65, %v66
  %v72 = vadd.f32 %v57, %v64
  %v73 = vadd.f32 %v58, %v63
  %v74 = vadd.f32 %v59, %v67
  %v75 = vadd.f32 %v60, %v66
  %v76 = vmul.f32 %v72, 0.2
  %v77 = vmul.f32 %v73, 0.2
  %v78 = vmul.f32 %v74, 0.2
  %v79 = vmul.f32 %v75, 0.2
  %v80 = vsub.f32 %v8, %v76
  %v81 = vsub.f32 %v9, %v77
  %v82 = vsub.f32 %v10, %v78
  %v83 = vsub.f32 %v11, %v79
  %v84 = vmul.f32 %v80, %v80
  %v85 = vmul.f32 %v81, %v81
  %v86 = vmul.f32 %v82, %v82
  %v87 = vmul.f32 %v83, %v83
  %vm92 = vcmask 1040384
  %v93 = vrot.slane %v76, 7
  %v94 = vrot.slane %v77, 7
  %v95 = vsel %vm92, %v93, %v94
  %v96 = vrot.slane %v78, 7
  %v97 = vrot.slane %v79, 7
  %v98 = vsel %vm92, %v96, %v97
  %v103 = vsub.f32 %v8, %v93
  %v104 = vsub.f32 %v9, %v95
  %v105 = vsub.f32 %v10, %v96
  %v106 = vsub.f32 %v11, %v98
  %v107 = vmul.f32 %v103, %v103
  %v108 = vmul.f32 %v104, %v104
  %v109 = vmul.f32 %v105, %v105
  %v110 = vmul.f32 %v106, %v106
  %v115 = vrot.slane %v107, 1
  %v116 = vrot.slane %v108, 1
  %v117 = vsel %vm16, %v115, %v116
  %v118 = vrot.slane %v109, 1
  %v119 = vrot.slane %v110, 1
  %v120 = vsel %vm16, %v118, %v119
  %v125 = vadd.f32 %v84, %v117
  %v126 = vadd.f32 %v85, %v116
  %v127 = vadd.f32 %v86, %v120
  %v128 = vadd.f32 %v87, %v119
  %vm129 = vcmask 1041408
  %v130 = vrot.slane %v76, 6
  %v131 = vrot.slane %v77, 6
  %v132 = vsel %vm129, %v130, %v131
  %v133 = vrot.slane %v78, 6
  %v134 = vrot.slane %v79, 6
  %v135 = vsel %vm129, %v133, %v134
  %v140 = vsub.f32 %v8, %v130
  %v141 = vsub.f32 %v9, %v132
  %v142 = vsub.f32 %v10, %v133
  %v143 = vsub.f32 %v11, %v135
  %v144 = vmul.f32 %v140, %v140
  %v145 = vmul.f32 %v141, %v141
  %v146 = vmul.f32 %v142, %v142
  %v147 = vmul.f32 %v143, %v143
  %v152 = vrot.slane %v144, 2
  %v153 = vrot.slane %v145, 2
  %v154 = vsel %vm31, %v152, %v153
  %v155 = vrot.slane %v146, 2
  %v156 = vrot.slane %v147, 2
  %v157 = vsel %vm31, %v155, %v156
  %v162 = vadd.f32 %v125, %v154
  %v163 = vadd.f32 %v126, %v153
  %v164 = vadd.f32 %v127, %v157
  %v165 = vadd.f32 %v128, %v156
  %vm166 = vcmask 1042432
  %v167 = vrot.slane %v76, 5
  %v168 = vrot.slane %v77, 5
  %v169 = vsel %vm166, %v167, %v168
  %v170 = vrot.slane %v78, 5
  %v171 = vrot.slane %v79, 5
  %v172 = vsel %vm166, %v170, %v171
  %v177 = vsub.f32 %v8, %v167
  %v178 = vsub.f32 %v9, %v169
  %v179 = vsub.f32 %v10, %v170
  %v180 = vsub.f32 %v11, %v172
  %v181 = vmul.f32 %v177, %v177
  %v182 = vmul.f32 %v178, %v178
  %v183 = vmul.f32 %v179, %v179
  %v184 = vmul.f32 %v180, %v180
  %v189 = vrot.slane %v181, 3
  %v190 = vrot.slane %v182, 3
  %v191 = vsel %vm46, %v189, %v190
  %v192 = vrot.slane %v183, 3
  %v193 = vrot.slane %v184, 3
  %v194 = vsel %vm46, %v192, %v193
  %v199 = vadd.f32 %v162, %v191
  %v200 = vadd.f32 %v163, %v190
  %v201 = vadd.f32 %v164, %v194
  %v202 = vadd.f32 %v165, %v193
  %v203 = vrot.slane %v76, 4
  %v204 = vrot.slane %v77, 4
  %v205 = vsel %vm61, %v203, %v204
  %v206 = vrot.slane %v78, 4
  %v207 = vrot.slane %v79, 4
  %v208 = vsel %vm61, %v206, %v207
  %v213 = vsub.f32 %v8, %v203
  %v214 = vsub.f32 %v9, %v205
  %v215 = vsub.f32 %v10, %v206
  %v216 = vsub.f32 %v11, %v208
  %v217 = vmul.f32 %v213, %v213
  %v218 = vmul.f32 %v214, %v214
  %v219 = vmul.f32 %v215, %v215
  %v220 = vmul.f32 %v216, %v216
  %v225 = vrot.slane %v217, 4
  %v226 = vrot.slane %v218, 4
  %v227 = vsel %vm61, %v225, %v226
  %v228 = vrot.slane %v219, 4
  %v229 = vrot.slane %v220, 4
  %v230 = vsel %vm61, %v228, %v229
  %v235 = vadd.f32 %v199, %v227
  %v236 = vadd.f32 %v200, %v226
  %v237 = vadd.f32 %v201, %v230
  %v238 = vadd.f32 %v202, %v229
  %v239 = vmul.f32 %v235, 0.25
  %v240 = vmul.f32 %v236, 0.25
  %v241 = vmul.f32 %v237, 0.25
  %v242 = vmul.f32 %v238, 0.25
  %v243 = vrsqrt.pop %v239
  %v244 = vmul.f32 %v239, %v243
  %vm245 = vcmp.eq.f32.partialorder %v239, inf
  %v246 = vsel %vm245, %v239, %v244
  %vm247 = vcmp.eq.f32.partialorder %v239, 0.0
  %v248 = vand.u32 %v239, 2147483648
  %v249 = vsel %vm247, %v248, %v246
  %v250 = vrsqrt.pop %v240
  %v251 = vmul.f32 %v240, %v250
  %vm252 = vcmp.eq.f32.partialorder %v240, inf
  %v253 = vsel %vm252, %v240, %v251
  %vm254 = vcmp.eq.f32.partialorder %v240, 0.0
  %v255 = vand.u32 %v240, 2147483648
  %v256 = vsel %vm254, %v255, %v253
  %v257 = vrsqrt.pop %v241
  %v258 = vmul.f32 %v241, %v257
  %vm259 = vcmp.eq.f32.partialorder %v241, inf
  %v260 = vsel %vm259, %v241, %v258
  %vm261 = vcmp.eq.f32.partialorder %v241, 0.0
  %v262 = vand.u32 %v241, 2147483648
  %v263 = vsel %vm261, %v262, %v260
  %v264 = vrsqrt.pop %v242
  %v265 = vmul.f32 %v242, %v264
  %vm266 = vcmp.eq.f32.partialorder %v242, inf
  %v267 = vsel %vm266, %v242, %v265
  %vm268 = vcmp.eq.f32.partialorder %v242, 0.0
  %v269 = vand.u32 %v242, 2147483648
  %v270 = vsel %vm268, %v269, %v267
  %vm271 = vcmp.ne.f32.partialorder %v249, %v249
  %vm272 = vcmp.ne.f32.partialorder %v256, %v256
  %vm273 = vcmp.ne.f32.partialorder %v263, %v263
  %vm274 = vcmp.ne.f32.partialorder %v270, %v270
  %v275 = vsub.f32 %v76, %v76
  %v276 = vsub.f32 %v77, %v77
  %v277 = vsub.f32 %v78, %v78
  %v278 = vsub.f32 %v79, %v79
  %v279 = vsel %vm271, %v275, %v249
  %v280 = vsel %vm272, %v276, %v256
  %v281 = vsel %vm273, %v277, %v263
  %v282 = vsel %vm274, %v278, %v270
  %vm283 = vcmask 31744
  %284 = vst.msk [vmem:[%s1] sm:$0xff] %vm283, %v279
  %vm285 = vcmask 27648
  %286 = vst.msk [vmem:[%s1 + $0x8] sm:$0xf] %vm285, %v280
  %287 = vst.msk [vmem:[%s1 + $0x10] sm:$0xff] %vm283, %v281
  %288 = vst.msk [vmem:[%s1 + $0x18] sm:$0xf] %vm285, %v282
  // Predicated region
  $region6: #{tpu_custom_call.1} parent=0 // pred_check
    _
  $region7: #{tpu_custom_call.1} parent=0 // pred_check_branch
    %290 = sbr.rel (0) target = $region9
  $region8: #{tpu_custom_call.1} parent=0 // pred_region
    _
  $region9: #{tpu_custom_call.1} parent=0 // pred_fallthru
    _
  // Predicated region
  $region10: #{tpu_custom_call.1} parent=0 // pred_check
    _
  $region11: #{tpu_custom_call.1} parent=0 // pred_check_branch
    %292 = sbr.rel (0) target = $region13
  $region12: #{tpu_custom_call.1} parent=0 // pred_region
    _
  $region13: #{tpu_custom_call.1} parent=0 // pred_fallthru
    _

</llo_original>
